<compile_context>
chip_gen: v6e
topology: v6e:2x2x1
jax: 0.10.0
libtpu: 0.0.40
codegen_flags: <defaults>
</compile_context>

<pallas_src>
import jax
import jax.numpy as jnp
from jax.experimental import pallas as pl
from jax.experimental.pallas import tpu as pltpu


def mlp_kernel(x_ref, w1_ref, b1_ref, w2_ref, b2_ref, w3_ref, b3_ref,
               w4_ref, b4_ref, o_ref):
    x = x_ref[...]                                        # (2, TB) f32
    # Layer 1 on the VPU: two broadcast FMAs (K=2 would waste the MXU).
    # w1_ref is (64, 2) f32; result is lane-dense (64, TB).
    h = (w1_ref[:, 0:1] * x[0:1, :]
         + w1_ref[:, 1:2] * x[1:2, :]
         + b1_ref[...])                                   # (64, TB) f32
    h = jnp.maximum(h, 0.0)
    # Layers 2-4 on the MXU: bf16 operands, f32 accumulation. N = TB lanes
    # keeps the MXU output fully occupied; bias/ReLU stay f32 on the VPU.
    h = jnp.dot(w2_ref[...], h.astype(jnp.bfloat16),
                preferred_element_type=jnp.float32) + b2_ref[...]   # (64, TB)
    h = jnp.maximum(h, 0.0)
    h = jnp.dot(w3_ref[...], h.astype(jnp.bfloat16),
                preferred_element_type=jnp.float32) + b3_ref[...]   # (64, TB)
    h = jnp.maximum(h, 0.0)
    out = jnp.dot(w4_ref[...], h.astype(jnp.bfloat16),
                  preferred_element_type=jnp.float32) + b4_ref[...]  # (4, TB)
    o_ref[...] = out.astype(o_ref.dtype)


def color_classifier_forward(x, params, *, block_b=4096):
    """x: (B, 2) float32. params: PyTorch-native (out, in) weights, (out, 1) biases."""
    B = x.shape[0]
    # Batch lives on the lane axis -> pad to a multiple of 128 lanes.
    padded_b = max(128, ((B + 127) // 128) * 128)
    tb = min(block_b, padded_b)
    tb = max(128, (tb // 128) * 128)                  # tile = multiple of 128 lanes
    padded_b = pl.cdiv(padded_b, tb) * tb             # batch = multiple of tile
    # v7x: give the "parallel" grid axis >= 2 steps so both TCs get work.
    if padded_b // tb == 1 and tb % 256 == 0:
        tb //= 2

    # Transpose to (2, padded_B): batch on lanes, features on sublanes.
    xt = jnp.zeros((2, padded_b), jnp.float32).at[:, :B].set(x.T)

    # Cast matmul weights to bf16 once (outside the kernel); layer-1 weights
    # and all biases stay f32 (VPU path).
    w2 = params["w2"].astype(jnp.bfloat16)
    w3 = params["w3"].astype(jnp.bfloat16)
    w4 = params["w4"].astype(jnp.bfloat16)

    const = lambda i: (0, 0)                          # weights resident in VMEM
    out_t = pl.pallas_call(
        mlp_kernel,
        out_shape=jax.ShapeDtypeStruct((4, padded_b), jnp.float32),
        grid=(padded_b // tb,),
        in_specs=[
            pl.BlockSpec((2, tb), lambda i: (0, i)),  # x: tiled over batch lanes
            pl.BlockSpec((64, 2), const),             # w1 (f32, VPU layer)
            pl.BlockSpec((64, 1), const),             # b1
            pl.BlockSpec((64, 64), const),            # w2 (bf16)
            pl.BlockSpec((64, 1), const),             # b2
            pl.BlockSpec((64, 64), const),            # w3 (bf16)
            pl.BlockSpec((64, 1), const),             # b3
            pl.BlockSpec((4, 64), const),             # w4 (bf16)
            pl.BlockSpec((4, 1), const),              # b4
        ],
        out_specs=pl.BlockSpec((4, tb), lambda i: (0, i)),
        compiler_params=pltpu.CompilerParams(
            dimension_semantics=("parallel",)),       # 2-TC sharding on v7x
    )(xt,
      params["w1"], params["b1"],
      w2, params["b2"],
      w3, params["b3"],
      w4, params["b4"])
    # Padded tail columns carry ReLU(bias)-propagated garbage; slice them off.
    return out_t[:, :B].T


def init_params(key):
    """PyTorch nn.Linear-style init U[-1/sqrt(fan_in), 1/sqrt(fan_in)].
    Weights stored PyTorch-native as (out, in); biases as (out, 1) columns."""
    dims = [(2, 64), (64, 64), (64, 64), (64, 4)]
    params = {}
    for i, (fan_in, fan_out) in enumerate(dims, start=1):
        key, kw, kb = jax.random.split(key, 3)
        bound = 1.0 / (fan_in ** 0.5)
        params[f"w{i}"] = jax.random.uniform(
            kw, (fan_out, fan_in), jnp.float32, -bound, bound)
        params[f"b{i}"] = jax.random.uniform(
            kb, (fan_out, 1), jnp.float32, -bound, bound)
    return params


def reference_forward(x, params):
    """Pure-JAX f32 reference matching the PyTorch module exactly."""
    h = jnp.maximum(x @ params["w1"].T + params["b1"].T, 0.0)
    h = jnp.maximum(h @ params["w2"].T + params["b2"].T, 0.0)
    h = jnp.maximum(h @ params["w3"].T + params["b3"].T, 0.0)
    return h @ params["w4"].T + params["b4"].T


if __name__ == "__main__":
    key = jax.random.PRNGKey(0)
    key, kx1, kx2 = jax.random.split(key, 3)
    params = init_params(key)

    # Small demo batch (matches the original B=8 usage).
    x_small = jax.random.normal(kx1, (8, 2), jnp.float32)
    out_small = jax.block_until_ready(color_classifier_forward(x_small, params))
    ref_small = reference_forward(x_small, params)
    assert out_small.shape == (8, 4)
    # bf16 matmul operands (f32 accumulate) -> loosened tolerance vs f32 ref.
    assert jnp.allclose(out_small, ref_small, atol=3e-2, rtol=3e-2)

    # Ragged batch to exercise tiling + tail padding + a multi-step grid.
    x_big = jax.random.normal(kx2, (1000, 2), jnp.float32)
    out_big = jax.block_until_ready(
        color_classifier_forward(x_big, params, block_b=512))
    ref_big = reference_forward(x_big, params)
    assert out_big.shape == (1000, 4)
    assert jnp.allclose(out_big, ref_big, atol=3e-2, rtol=3e-2)

    print("KERNEL_OK")
</pallas_src>

<mosaic_0001>
module attributes {stable_mosaic.version = 11 : i64} {
  func.func @mlp_kernel(%arg0: i32, %arg1: memref<2x128xf32, #tpu.memory_space<vmem>>, %arg2: memref<64x2xf32, #tpu.memory_space<vmem>>, %arg3: memref<64x1xf32, #tpu.memory_space<vmem>>, %arg4: memref<64x64xbf16, #tpu.memory_space<vmem>>, %arg5: memref<64x1xf32, #tpu.memory_space<vmem>>, %arg6: memref<64x64xbf16, #tpu.memory_space<vmem>>, %arg7: memref<64x1xf32, #tpu.memory_space<vmem>>, %arg8: memref<4x64xbf16, #tpu.memory_space<vmem>>, %arg9: memref<4x1xf32, #tpu.memory_space<vmem>>, %arg10: memref<4x128xf32, #tpu.memory_space<vmem>>) attributes {dimension_semantics = [#tpu.dimension_semantics<parallel>], iteration_bounds = array<i64: 1>, scalar_prefetch = 0 : i64, scratch_operands = 0 : i64, tpu.core_type = #tpu.core_type<tc>, window_params = [{transform_indices = @transform_0, window_bounds = array<i64: 2, 128>}, {pipeline_mode = #tpu.pipeline_mode<synchronous>, transform_indices = @transform_1, window_bounds = array<i64: 64, 2>}, {pipeline_mode = #tpu.pipeline_mode<synchronous>, transform_indices = @transform_2, window_bounds = array<i64: 64, 1>}, {pipeline_mode = #tpu.pipeline_mode<synchronous>, transform_indices = @transform_3, window_bounds = array<i64: 64, 64>}, {pipeline_mode = #tpu.pipeline_mode<synchronous>, transform_indices = @transform_4, window_bounds = array<i64: 64, 1>}, {pipeline_mode = #tpu.pipeline_mode<synchronous>, transform_indices = @transform_5, window_bounds = array<i64: 64, 64>}, {pipeline_mode = #tpu.pipeline_mode<synchronous>, transform_indices = @transform_6, window_bounds = array<i64: 64, 1>}, {pipeline_mode = #tpu.pipeline_mode<synchronous>, transform_indices = @transform_7, window_bounds = array<i64: 4, 64>}, {pipeline_mode = #tpu.pipeline_mode<synchronous>, transform_indices = @transform_8, window_bounds = array<i64: 4, 1>}, {transform_indices = @transform_9, window_bounds = array<i64: 4, 128>}]} {
    %c0 = arith.constant 0 : index
    %c0_0 = arith.constant 0 : index
    %0 = vector.load %arg1[%c0, %c0_0] : memref<2x128xf32, #tpu.memory_space<vmem>>, vector<2x128xf32>
    %c0_1 = arith.constant 0 : index
    %c0_2 = arith.constant 0 : index
    %1 = vector.load %arg2[%c0_1, %c0_2] : memref<64x2xf32, #tpu.memory_space<vmem>>, vector<64x1xf32>
    %2 = vector.extract_strided_slice %0 {offsets = [0, 0], sizes = [1, 128], strides = [1, 1]} : vector<2x128xf32> to vector<1x128xf32>
    %3 = vector.broadcast %1 : vector<64x1xf32> to vector<64x128xf32>
    %4 = vector.broadcast %2 : vector<1x128xf32> to vector<64x128xf32>
    %5 = arith.mulf %3, %4 : vector<64x128xf32>
    %c0_3 = arith.constant 0 : index
    %c1 = arith.constant 1 : index
    %6 = vector.load %arg2[%c0_3, %c1] : memref<64x2xf32, #tpu.memory_space<vmem>>, vector<64x1xf32>
    %7 = vector.extract_strided_slice %0 {offsets = [1, 0], sizes = [1, 128], strides = [1, 1]} : vector<2x128xf32> to vector<1x128xf32>
    %8 = vector.broadcast %6 : vector<64x1xf32> to vector<64x128xf32>
    %9 = vector.broadcast %7 : vector<1x128xf32> to vector<64x128xf32>
    %10 = arith.mulf %8, %9 : vector<64x128xf32>
    %11 = arith.addf %5, %10 : vector<64x128xf32>
    %c0_4 = arith.constant 0 : index
    %c0_5 = arith.constant 0 : index
    %12 = vector.load %arg3[%c0_4, %c0_5] : memref<64x1xf32, #tpu.memory_space<vmem>>, vector<64x1xf32>
    %13 = vector.broadcast %12 : vector<64x1xf32> to vector<64x128xf32>
    %14 = arith.addf %11, %13 : vector<64x128xf32>
    %cst = arith.constant 0.000000e+00 : f32
    %15 = vector.broadcast %cst : f32 to vector<64x128xf32>
    %16 = arith.maximumf %14, %15 : vector<64x128xf32>
    %c0_6 = arith.constant 0 : index
    %c0_7 = arith.constant 0 : index
    %17 = vector.load %arg4[%c0_6, %c0_7] : memref<64x64xbf16, #tpu.memory_space<vmem>>, vector<64x64xbf16>
    %18 = arith.truncf %16 : vector<64x128xf32> to vector<64x128xbf16>
    %cst_8 = arith.constant dense<0.000000e+00> : vector<64x128xf32>
    %19 = tpu.matmul %17, %18, %cst_8 {dimension_numbers = #tpu.dot_dimension_numbers<[1], [0], [0], [1], [0, 0, 1, 1], [], []>} : vector<64x64xbf16>, vector<64x128xbf16>, vector<64x128xf32> -> vector<64x128xf32>
    %c0_9 = arith.constant 0 : index
    %c0_10 = arith.constant 0 : index
    %20 = vector.load %arg5[%c0_9, %c0_10] : memref<64x1xf32, #tpu.memory_space<vmem>>, vector<64x1xf32>
    %21 = vector.broadcast %20 : vector<64x1xf32> to vector<64x128xf32>
    %22 = arith.addf %19, %21 : vector<64x128xf32>
    %cst_11 = arith.constant 0.000000e+00 : f32
    %23 = vector.broadcast %cst_11 : f32 to vector<64x128xf32>
    %24 = arith.maximumf %22, %23 : vector<64x128xf32>
    %c0_12 = arith.constant 0 : index
    %c0_13 = arith.constant 0 : index
    %25 = vector.load %arg6[%c0_12, %c0_13] : memref<64x64xbf16, #tpu.memory_space<vmem>>, vector<64x64xbf16>
    %26 = arith.truncf %24 : vector<64x128xf32> to vector<64x128xbf16>
    %cst_14 = arith.constant dense<0.000000e+00> : vector<64x128xf32>
    %27 = tpu.matmul %25, %26, %cst_14 {dimension_numbers = #tpu.dot_dimension_numbers<[1], [0], [0], [1], [0, 0, 1, 1], [], []>} : vector<64x64xbf16>, vector<64x128xbf16>, vector<64x128xf32> -> vector<64x128xf32>
    %c0_15 = arith.constant 0 : index
    %c0_16 = arith.constant 0 : index
    %28 = vector.load %arg7[%c0_15, %c0_16] : memref<64x1xf32, #tpu.memory_space<vmem>>, vector<64x1xf32>
    %29 = vector.broadcast %28 : vector<64x1xf32> to vector<64x128xf32>
    %30 = arith.addf %27, %29 : vector<64x128xf32>
    %cst_17 = arith.constant 0.000000e+00 : f32
    %31 = vector.broadcast %cst_17 : f32 to vector<64x128xf32>
    %32 = arith.maximumf %30, %31 : vector<64x128xf32>
    %c0_18 = arith.constant 0 : index
    %c0_19 = arith.constant 0 : index
    %33 = vector.load %arg8[%c0_18, %c0_19] : memref<4x64xbf16, #tpu.memory_space<vmem>>, vector<4x64xbf16>
    %34 = arith.truncf %32 : vector<64x128xf32> to vector<64x128xbf16>
    %cst_20 = arith.constant dense<0.000000e+00> : vector<4x128xf32>
    %35 = tpu.matmul %33, %34, %cst_20 {dimension_numbers = #tpu.dot_dimension_numbers<[1], [0], [0], [1], [0, 0, 1, 1], [], []>} : vector<4x64xbf16>, vector<64x128xbf16>, vector<4x128xf32> -> vector<4x128xf32>
    %c0_21 = arith.constant 0 : index
    %c0_22 = arith.constant 0 : index
    %36 = vector.load %arg9[%c0_21, %c0_22] : memref<4x1xf32, #tpu.memory_space<vmem>>, vector<4x1xf32>
    %37 = vector.broadcast %36 : vector<4x1xf32> to vector<4x128xf32>
    %38 = arith.addf %35, %37 : vector<4x128xf32>
    %c0_23 = arith.constant 0 : index
    %c0_24 = arith.constant 0 : index
    %39 = vector.load %arg10[%c0_23, %c0_24] : memref<4x128xf32, #tpu.memory_space<vmem>>, vector<4x128xf32>
    tpu.vector_store %arg10[%c0_23, %c0_24], %38 {strides = array<i32>} : memref<4x128xf32, #tpu.memory_space<vmem>>, vector<4x128xf32>,
    return
  }
  func.func @transform_0(%arg0: i32) -> (i32, i32) {
    %c0_i32 = arith.constant 0 : i32
    %c0_i32_0 = arith.constant 0 : i32
    return %c0_i32, %arg0 : i32, i32
  }
  func.func @transform_1(%arg0: i32) -> (i32, i32) {
    %c0_i32 = arith.constant 0 : i32
    %c0_i32_0 = arith.constant 0 : i32
    %c0_i32_1 = arith.constant 0 : i32
    return %c0_i32, %c0_i32_0 : i32, i32
  }
  func.func @transform_2(%arg0: i32) -> (i32, i32) {
    %c0_i32 = arith.constant 0 : i32
    %c0_i32_0 = arith.constant 0 : i32
    %c0_i32_1 = arith.constant 0 : i32
    return %c0_i32, %c0_i32_0 : i32, i32
  }
  func.func @transform_3(%arg0: i32) -> (i32, i32) {
    %c0_i32 = arith.constant 0 : i32
    %c0_i32_0 = arith.constant 0 : i32
    %c0_i32_1 = arith.constant 0 : i32
    return %c0_i32, %c0_i32_0 : i32, i32
  }
  func.func @transform_4(%arg0: i32) -> (i32, i32) {
    %c0_i32 = arith.constant 0 : i32
    %c0_i32_0 = arith.constant 0 : i32
    %c0_i32_1 = arith.constant 0 : i32
    return %c0_i32, %c0_i32_0 : i32, i32
  }
  func.func @transform_5(%arg0: i32) -> (i32, i32) {
    %c0_i32 = arith.constant 0 : i32
    %c0_i32_0 = arith.constant 0 : i32
    %c0_i32_1 = arith.constant 0 : i32
    return %c0_i32, %c0_i32_0 : i32, i32
  }
  func.func @transform_6(%arg0: i32) -> (i32, i32) {
    %c0_i32 = arith.constant 0 : i32
    %c0_i32_0 = arith.constant 0 : i32
    %c0_i32_1 = arith.constant 0 : i32
    return %c0_i32, %c0_i32_0 : i32, i32
  }
  func.func @transform_7(%arg0: i32) -> (i32, i32) {
    %c0_i32 = arith.constant 0 : i32
    %c0_i32_0 = arith.constant 0 : i32
    %c0_i32_1 = arith.constant 0 : i32
    return %c0_i32, %c0_i32_0 : i32, i32
  }
  func.func @transform_8(%arg0: i32) -> (i32, i32) {
    %c0_i32 = arith.constant 0 : i32
    %c0_i32_0 = arith.constant 0 : i32
    %c0_i32_1 = arith.constant 0 : i32
    return %c0_i32, %c0_i32_0 : i32, i32
  }
  func.func @transform_9(%arg0: i32) -> (i32, i32) {
    %c0_i32 = arith.constant 0 : i32
    %c0_i32_0 = arith.constant 0 : i32
    return %c0_i32, %arg0 : i32, i32
  }
}

</mosaic_0001>

<llo_original>
// kernel: tpu_custom_call.1
$region0: #{tpu_custom_call.1}
  #allocation0 [shape = 'u32[]', space=smem, size = 0x4, offset = 0x4, fixed_abs, tag = 'smem constant byte address 0x4 - core index']
  #allocation1 [shape = 'u32[144,128]{1,0:T(1,128)}', space=vmem, size = 0x12000, scoped, tag = 'internal scratch']
  %s0 = inlined_call_operand.vmem [shape: f32[2,128], index: 0, kind: input, shape index: {}]
  %s1 = inlined_call_operand.vmem [shape: f32[64,2], index: 1, kind: input, shape index: {}]
  %s2 = inlined_call_operand.vmem [shape: f32[64,1], index: 2, kind: input, shape index: {}]
  %s3 = inlined_call_operand.vmem [shape: bf16[64,64], index: 3, kind: input, shape index: {}]
  %s4 = inlined_call_operand.vmem [shape: f32[64,1], index: 4, kind: input, shape index: {}]
  %s5 = inlined_call_operand.vmem [shape: bf16[64,64], index: 5, kind: input, shape index: {}]
  %s6 = inlined_call_operand.vmem [shape: f32[64,1], index: 6, kind: input, shape index: {}]
  %s7 = inlined_call_operand.vmem [shape: bf16[4,64], index: 7, kind: input, shape index: {}]
  %s8 = inlined_call_operand.vmem [shape: f32[4,1], index: 8, kind: input, shape index: {}]
  %s9 = inlined_call_operand.hbm [shape: f32[4,128], index: 9, kind: output, shape index: {}]
  %s10 = sld [smem:[#allocation0]]
  $region46: #{tpu_custom_call.1} parent=0
    _
  %s12 = ssub.s32 1, %s10
  %s13 = scalar_select 0, %s12, %s10
  $region1: #{tpu_custom_call.1} parent=0
    #allocation2 [shape = 'u8[2048]{0}', space=vmem, size = 0x800, scoped, tag = 'output window, operand 0, single buffered']
    #allocation3 [shape = 's32[1]{0}', space=sflag, size = 0x4, scoped, tag = 'scoped memory for tpu_custom_call.1']
    %14 = vsyncpa [#allocation3], 0
    // Predicated region
    $region2: #{tpu_custom_call.1} parent=1 // pred_check
      _
    $region3: #{tpu_custom_call.1} parent=1 // pred_check_branch
      %16 = sbr.rel (0) target = $region5
    $region4: #{tpu_custom_call.1} parent=1 // pred_region
      _
    $region5: #{tpu_custom_call.1} parent=1 // pred_fallthru
      _
    // Predicated region
    $region6: #{tpu_custom_call.1} parent=1 // pred_check
      _
    $region7: #{tpu_custom_call.1} parent=1 // pred_check_branch
      %18 = sbr.rel (0) target = $region9
    $region8: #{tpu_custom_call.1} parent=1 // pred_region
      _
    $region9: #{tpu_custom_call.1} parent=1 // pred_fallthru
      _
    // Predicated region
    $region10: #{tpu_custom_call.1} parent=1 // pred_check
      _
    $region11: #{tpu_custom_call.1} parent=1 // pred_check_branch
      %20 = sbr.rel (0) target = $region13
    $region12: #{tpu_custom_call.1} parent=1 // pred_region
      _
    $region13: #{tpu_custom_call.1} parent=1 // pred_fallthru
      _
    // Predicated region
    $region14: #{tpu_custom_call.1} parent=1 // pred_check
      _
    $region15: #{tpu_custom_call.1} parent=1 // pred_check_branch
      %22 = sbr.rel (0) target = $region17
    $region16: #{tpu_custom_call.1} parent=1 // pred_region
      _
    $region17: #{tpu_custom_call.1} parent=1 // pred_fallthru
      _
    // Predicated region
    $region18: #{tpu_custom_call.1} parent=1 // pred_check
      _
    $region19: #{tpu_custom_call.1} parent=1 // pred_check_branch
      %24 = sbr.rel (0) target = $region21
    $region20: #{tpu_custom_call.1} parent=1 // pred_region
      _
    $region21: #{tpu_custom_call.1} parent=1 // pred_fallthru
      _
    // Predicated region
    $region22: #{tpu_custom_call.1} parent=1 // pred_check
      _
    $region23: #{tpu_custom_call.1} parent=1 // pred_check_branch
      %26 = sbr.rel (0) target = $region25
    $region24: #{tpu_custom_call.1} parent=1 // pred_region
      _
    $region25: #{tpu_custom_call.1} parent=1 // pred_fallthru
      _
    // Predicated region
    $region26: #{tpu_custom_call.1} parent=1 // pred_check
      _
    $region27: #{tpu_custom_call.1} parent=1 // pred_check_branch
      %28 = sbr.rel (0) target = $region29
    $region28: #{tpu_custom_call.1} parent=1 // pred_region
      _
    $region29: #{tpu_custom_call.1} parent=1 // pred_fallthru
      _
    // Predicated region
    $region30: #{tpu_custom_call.1} parent=1 // pred_check
      _
    $region31: #{tpu_custom_call.1} parent=1 // pred_check_branch
      %30 = sbr.rel (0) target = $region33
    $region32: #{tpu_custom_call.1} parent=1 // pred_region
      _
    $region33: #{tpu_custom_call.1} parent=1 // pred_fallthru
      _
    // Predicated region
    $region34: #{tpu_custom_call.1} parent=1 // pred_check
      _
    $region35: #{tpu_custom_call.1} parent=1 // pred_check_branch
      %32 = sbr.rel (0) target = $region37
    $region36: #{tpu_custom_call.1} parent=1 // pred_region
      _
    $region37: #{tpu_custom_call.1} parent=1 // pred_fallthru
      _
    %v34 = vld [vmem:[%s0] sm:$0x3]
    %v35 = vld [vmem:[%s1] sm:$0xff]
    %v36 = vld [vmem:[%s1 + $0x8] sm:$0xff]
    %v37 = vld [vmem:[%s1 + $0x10] sm:$0xff]
    %v38 = vld [vmem:[%s1 + $0x18] sm:$0xff]
    %v39 = vld [vmem:[%s1 + $0x20] sm:$0xff]
    %v40 = vld [vmem:[%s1 + $0x28] sm:$0xff]
    %v41 = vld [vmem:[%s1 + $0x30] sm:$0xff]
    %v42 = vld [vmem:[%s1 + $0x38] sm:$0xff]
    %44 = vset.pattern.permute.xlu0 0
    %45 = vperm.xlu0 %44, %v35
    %v46 = vpop.permute.xlu0 %45
    %49 = vset.pattern.permute.xlu0 0
    %50 = vperm.xlu0 %49, %v36
    %v51 = vpop.permute.xlu0 %50
    %54 = vset.pattern.permute.xlu0 0
    %55 = vperm.xlu0 %54, %v37
    %v56 = vpop.permute.xlu0 %55
    %59 = vset.pattern.permute.xlu0 0
    %60 = vperm.xlu0 %59, %v38
    %v61 = vpop.permute.xlu0 %60
    %64 = vset.pattern.permute.xlu0 0
    %65 = vperm.xlu0 %64, %v39
    %v66 = vpop.permute.xlu0 %65
    %69 = vset.pattern.permute.xlu0 0
    %70 = vperm.xlu0 %69, %v40
    %v71 = vpop.permute.xlu0 %70
    %74 = vset.pattern.permute.xlu0 0
    %75 = vperm.xlu0 %74, %v41
    %v76 = vpop.permute.xlu0 %75
    %79 = vset.pattern.permute.xlu0 0
    %80 = vperm.xlu0 %79, %v42
    %v81 = vpop.permute.xlu0 %80
    %v83 = vlaneseq
    %v84 = vshrl.u32 %v83, 7
    %v85 = vsub.s32 0, %v84
    %v86 = vrot.slane %v34, %v85
    %v87 = vmul.f32 %v46, %v86
    %v88 = vmul.f32 %v51, %v86
    %v89 = vmul.f32 %v56, %v86
    %v90 = vmul.f32 %v61, %v86
    %v91 = vmul.f32 %v66, %v86
    %v92 = vmul.f32 %v71, %v86
    %v93 = vmul.f32 %v76, %v86
    %v94 = vmul.f32 %v81, %v86
    %95 = vset.pattern.permute.xlu0 1
    %96 = vperm.xlu0 %95, %v35
    %v97 = vpop.permute.xlu0 %96
    %99 = vset.pattern.permute.xlu0 1
    %100 = vperm.xlu0 %99, %v36
    %v101 = vpop.permute.xlu0 %100
    %103 = vset.pattern.permute.xlu0 1
    %104 = vperm.xlu0 %103, %v37
    %v105 = vpop.permute.xlu0 %104
    %107 = vset.pattern.permute.xlu0 1
    %108 = vperm.xlu0 %107, %v38
    %v109 = vpop.permute.xlu0 %108
    %111 = vset.pattern.permute.xlu0 1
    %112 = vperm.xlu0 %111, %v39
    %v113 = vpop.permute.xlu0 %112
    %115 = vset.pattern.permute.xlu0 1
    %116 = vperm.xlu0 %115, %v40
    %v117 = vpop.permute.xlu0 %116
    %119 = vset.pattern.permute.xlu0 1
    %120 = vperm.xlu0 %119, %v41
    %v121 = vpop.permute.xlu0 %120
    %123 = vset.pattern.permute.xlu0 1
    %124 = vperm.xlu0 %123, %v42
    %v125 = vpop.permute.xlu0 %124
    %v127 = vlaneseq
    %v128 = vshrl.u32 %v127, 7
    %v129 = vsub.s32 1, %v128
    %v130 = vrot.slane %v34, %v129
    %v131 = vmul.f32 %v97, %v130
    %v132 = vmul.f32 %v101, %v130
    %v133 = vmul.f32 %v105, %v130
    %v134 = vmul.f32 %v109, %v130
    %v135 = vmul.f32 %v113, %v130
    %v136 = vmul.f32 %v117, %v130
    %v137 = vmul.f32 %v121, %v130
    %v138 = vmul.f32 %v125, %v130
    %v139 = vadd.f32 %v87, %v131
    %v140 = vadd.f32 %v88, %v132
    %v141 = vadd.f32 %v89, %v133
    %v142 = vadd.f32 %v90, %v134
    %v143 = vadd.f32 %v91, %v135
    %v144 = vadd.f32 %v92, %v136
    %v145 = vadd.f32 %v93, %v137
    %v146 = vadd.f32 %v94, %v138
    %v147 = vld [vmem:[%s2] sm:$0xff]
    %v148 = vld [vmem:[%s2 + $0x8] sm:$0xff]
    %v149 = vld [vmem:[%s2 + $0x10] sm:$0xff]
    %v150 = vld [vmem:[%s2 + $0x18] sm:$0xff]
    %v151 = vld [vmem:[%s2 + $0x20] sm:$0xff]
    %v152 = vld [vmem:[%s2 + $0x28] sm:$0xff]
    %v153 = vld [vmem:[%s2 + $0x30] sm:$0xff]
    %v154 = vld [vmem:[%s2 + $0x38] sm:$0xff]
    %156 = vset.pattern.permute.xlu0 0
    %157 = vperm.xlu0 %156, %v147
    %v158 = vpop.permute.xlu0 %157
    %161 = vset.pattern.permute.xlu0 0
    %162 = vperm.xlu0 %161, %v148
    %v163 = vpop.permute.xlu0 %162
    %166 = vset.pattern.permute.xlu0 0
    %167 = vperm.xlu0 %166, %v149
    %v168 = vpop.permute.xlu0 %167
    %171 = vset.pattern.permute.xlu0 0
    %172 = vperm.xlu0 %171, %v150
    %v173 = vpop.permute.xlu0 %172
    %176 = vset.pattern.permute.xlu0 0
    %177 = vperm.xlu0 %176, %v151
    %v178 = vpop.permute.xlu0 %177
    %181 = vset.pattern.permute.xlu0 0
    %182 = vperm.xlu0 %181, %v152
    %v183 = vpop.permute.xlu0 %182
    %186 = vset.pattern.permute.xlu0 0
    %187 = vperm.xlu0 %186, %v153
    %v188 = vpop.permute.xlu0 %187
    %191 = vset.pattern.permute.xlu0 0
    %192 = vperm.xlu0 %191, %v154
    %v193 = vpop.permute.xlu0 %192
    %v195 = vadd.f32 %v139, %v158
    %v196 = vadd.f32 %v140, %v163
    %v197 = vadd.f32 %v141, %v168
    %v198 = vadd.f32 %v142, %v173
    %v199 = vadd.f32 %v143, %v178
    %v200 = vadd.f32 %v144, %v183
    %v201 = vadd.f32 %v145, %v188
    %v202 = vadd.f32 %v146, %v193
    %v203 = vmax.f32 %v195, 0.0
    %v204 = vmax.f32 %v196, 0.0
    %v205 = vmax.f32 %v197, 0.0
    %v206 = vmax.f32 %v198, 0.0
    %v207 = vmax.f32 %v199, 0.0
    %v208 = vmax.f32 %v200, 0.0
    %v209 = vmax.f32 %v201, 0.0
    %v210 = vmax.f32 %v202, 0.0
    %v211 = vld [vmem:[%s3] sm:$0xf]
    %v212 = vld [vmem:[%s3 + $0x4] sm:$0xf]
    %v213 = vld [vmem:[%s3 + $0x8] sm:$0xf]
    %v214 = vld [vmem:[%s3 + $0xc] sm:$0xf]
    %v215 = vld [vmem:[%s3 + $0x10] sm:$0xf]
    %v216 = vld [vmem:[%s3 + $0x14] sm:$0xf]
    %v217 = vld [vmem:[%s3 + $0x18] sm:$0xf]
    %v218 = vld [vmem:[%s3 + $0x1c] sm:$0xf]
    %v219 = vpack.c.bf16 %v204, %v203
    %v220 = vpack.c.bf16 %v206, %v205
    %v221 = vpack.c.bf16 %v208, %v207
    %v222 = vpack.c.bf16 %v210, %v209
    %v223 = vld [vmem:[%s4] sm:$0xff]
    %v224 = vld [vmem:[%s4 + $0x8] sm:$0xff]
    %v225 = vld [vmem:[%s4 + $0x10] sm:$0xff]
    %v226 = vld [vmem:[%s4 + $0x18] sm:$0xff]
    %v227 = vld [vmem:[%s4 + $0x20] sm:$0xff]
    %v228 = vld [vmem:[%s4 + $0x28] sm:$0xff]
    %v229 = vld [vmem:[%s4 + $0x30] sm:$0xff]
    %v230 = vld [vmem:[%s4 + $0x38] sm:$0xff]
    %232 = vset.pattern.permute.xlu0 0
    %233 = vperm.xlu0 %232, %v223
    %v234 = vpop.permute.xlu0 %233
    %237 = vset.pattern.permute.xlu0 0
    %238 = vperm.xlu0 %237, %v224
    %v239 = vpop.permute.xlu0 %238
    %242 = vset.pattern.permute.xlu0 0
    %243 = vperm.xlu0 %242, %v225
    %v244 = vpop.permute.xlu0 %243
    %247 = vset.pattern.permute.xlu0 0
    %248 = vperm.xlu0 %247, %v226
    %v249 = vpop.permute.xlu0 %248
    %252 = vset.pattern.permute.xlu0 0
    %253 = vperm.xlu0 %252, %v227
    %v254 = vpop.permute.xlu0 %253
    %257 = vset.pattern.permute.xlu0 0
    %258 = vperm.xlu0 %257, %v228
    %v259 = vpop.permute.xlu0 %258
    %262 = vset.pattern.permute.xlu0 0
    %263 = vperm.xlu0 %262, %v229
    %v264 = vpop.permute.xlu0 %263
    %267 = vset.pattern.permute.xlu0 0
    %268 = vperm.xlu0 %267, %v230
    %v269 = vpop.permute.xlu0 %268
    %v279 = vunpack.c.l.b16 %v211
    %v280 = vunpack.c.l.b16 %v212
    %v281 = vunpack.c.l.b16 %v213
    %v282 = vunpack.c.l.b16 %v214
    %v283 = vunpack.c.l.b16 %v215
    %v284 = vunpack.c.l.b16 %v216
    %v285 = vunpack.c.l.b16 %v217
    %v286 = vunpack.c.l.b16 %v218
    %v287 = vpack.c.b16 %v280, %v279
    %v288 = vpack.c.b16 %v282, %v281
    %v289 = vpack.c.b16 %v284, %v283
    %v290 = vpack.c.b16 %v286, %v285
    %vm291 = vcmask 523264
    %v293 = vsel %vm291, %v287, 0
    %v296 = vsel %vm291, %v288, 0
    %v299 = vsel %vm291, %v289, 0
    %v302 = vsel %vm291, %v290, 0
    %304 = vmatprep.subr.bf16.mxu0 0
    %305 = vmatpush1.bf16.msra.mxu0 0
    %306 = vmatprep.subr.bf16.mxu0 0
    %307 = vmatpush1.bf16.msra.mxu0 0
    %308 = vmatprep.subr.bf16.mxu0 0
    %309 = vmatpush1.bf16.msra.mxu0 0
    %310 = vmatprep.subr.bf16.mxu0 0
    %311 = vmatpush1.bf16.msra.mxu0 0
    %312 = vmatprep.subr.bf16.mxu0 0
    %313 = vmatpush1.bf16.msra.mxu0 %v222
    %314 = vmatprep.subr.bf16.mxu0 0
    %315 = vmatpush1.bf16.msra.mxu0 %v221
    %316 = vmatprep.subr.bf16.mxu0 0
    %317 = vmatpush1.bf16.msra.mxu0 %v220
    %318 = vmatprep.subr.bf16.mxu0 0
    %319 = vmatpush1.bf16.msra.mxu0 %v219
    %320 = vmatprep.subr.bf16.mxu0 0
    %321 = vmatpush2.bf16.msra.mxu0 0
    %322 = vmatprep.subr.bf16.mxu0 0
    %323 = vmatpush2.bf16.msra.mxu0 0
    %324 = vmatprep.subr.bf16.mxu0 0
    %325 = vmatpush2.bf16.msra.mxu0 0
    %326 = vmatprep.subr.bf16.mxu0 0
    %327 = vmatpush2.bf16.msra.mxu0 0
    %328 = vmatprep.subr.bf16.mxu0 0
    %329 = vmatpush2.bf16.msra.mxu0 0
    %330 = vmatprep.subr.bf16.mxu0 0
    %331 = vmatpush2.bf16.msra.mxu0 0
    %332 = vmatprep.subr.bf16.mxu0 0
    %333 = vmatpush2.bf16.msra.mxu0 0
    %334 = vmatprep.subr.bf16.mxu0 0
    %335 = vmatpush2.bf16.msra.mxu0 0
    %336 = vmatprep.mubr.bf16.mxu0 0
    %337 = vmatmul.mubr.bf16.gmra.mxu0 %v293
    %v338 = vpop.f32.mrf.mxu0
    %v339 = vadd.f32 %v234, %v338
    %v340 = vpop.f32.mrf.mxu0
    %v341 = vpop.f32.mrf.mxu0
    %v342 = vadd.f32 %v239, %v341
    %v343 = vpop.f32.mrf.mxu0
    %344 = vmatprep.mubr.bf16.mxu0 0
    %345 = vmatmul.mubr.bf16.gmra.mxu0 %v296
    %v346 = vpop.f32.mrf.mxu0
    %v347 = vadd.f32 %v244, %v346
    %v348 = vpop.f32.mrf.mxu0
    %v349 = vpop.f32.mrf.mxu0
    %v350 = vadd.f32 %v249, %v349
    %v351 = vpop.f32.mrf.mxu0
    %352 = vmatprep.mubr.bf16.mxu0 0
    %353 = vmatmul.mubr.bf16.gmra.mxu0 %v299
    %v354 = vpop.f32.mrf.mxu0
    %v355 = vadd.f32 %v254, %v354
    %v356 = vpop.f32.mrf.mxu0
    %v357 = vpop.f32.mrf.mxu0
    %v358 = vadd.f32 %v259, %v357
    %v359 = vpop.f32.mrf.mxu0
    %360 = vmatprep.mubr.bf16.mxu0 0
    %361 = vmatmul.mubr.bf16.gmra.mxu0 %v302
    %v362 = vpop.f32.mrf.mxu0
    %v363 = vadd.f32 %v264, %v362
    %v364 = vpop.f32.mrf.mxu0
    %v365 = vpop.f32.mrf.mxu0
    %v366 = vadd.f32 %v269, %v365
    %v367 = vpop.f32.mrf.mxu0
    %368 = vdwg.mxu0
    %v369 = vmax.f32 %v339, 0.0
    %v370 = vmax.f32 %v342, 0.0
    %v371 = vmax.f32 %v347, 0.0
    %v372 = vmax.f32 %v350, 0.0
    %v373 = vmax.f32 %v355, 0.0
    %v374 = vmax.f32 %v358, 0.0
    %v375 = vmax.f32 %v363, 0.0
    %v376 = vmax.f32 %v366, 0.0
    %v377 = vld [vmem:[%s5] sm:$0xf]
    %v378 = vld [vmem:[%s5 + $0x4] sm:$0xf]
    %v379 = vld [vmem:[%s5 + $0x8] sm:$0xf]
    %v380 = vld [vmem:[%s5 + $0xc] sm:$0xf]
    %v381 = vld [vmem:[%s5 + $0x10] sm:$0xf]
    %v382 = vld [vmem:[%s5 + $0x14] sm:$0xf]
    %v383 = vld [vmem:[%s5 + $0x18] sm:$0xf]
    %v384 = vld [vmem:[%s5 + $0x1c] sm:$0xf]
    %v385 = vpack.c.bf16 %v370, %v369
    %v386 = vpack.c.bf16 %v372, %v371
    %v387 = vpack.c.bf16 %v374, %v373
    %v388 = vpack.c.bf16 %v376, %v375
    %v389 = vld [vmem:[%s6] sm:$0xff]
    %v390 = vld [vmem:[%s6 + $0x8] sm:$0xff]
    %v391 = vld [vmem:[%s6 + $0x10] sm:$0xff]
    %v392 = vld [vmem:[%s6 + $0x18] sm:$0xff]
    %v393 = vld [vmem:[%s6 + $0x20] sm:$0xff]
    %v394 = vld [vmem:[%s6 + $0x28] sm:$0xff]
    %v395 = vld [vmem:[%s6 + $0x30] sm:$0xff]
    %v396 = vld [vmem:[%s6 + $0x38] sm:$0xff]
    %398 = vset.pattern.permute.xlu0 0
    %399 = vperm.xlu0 %398, %v389
    %v400 = vpop.permute.xlu0 %399
    %403 = vset.pattern.permute.xlu0 0
    %404 = vperm.xlu0 %403, %v390
    %v405 = vpop.permute.xlu0 %404
    %408 = vset.pattern.permute.xlu0 0
    %409 = vperm.xlu0 %408, %v391
    %v410 = vpop.permute.xlu0 %409
    %413 = vset.pattern.permute.xlu0 0
    %414 = vperm.xlu0 %413, %v392
    %v415 = vpop.permute.xlu0 %414
    %418 = vset.pattern.permute.xlu0 0
    %419 = vperm.xlu0 %418, %v393
    %v420 = vpop.permute.xlu0 %419
    %423 = vset.pattern.permute.xlu0 0
    %424 = vperm.xlu0 %423, %v394
    %v425 = vpop.permute.xlu0 %424
    %428 = vset.pattern.permute.xlu0 0
    %429 = vperm.xlu0 %428, %v395
    %v430 = vpop.permute.xlu0 %429
    %433 = vset.pattern.permute.xlu0 0
    %434 = vperm.xlu0 %433, %v396
    %v435 = vpop.permute.xlu0 %434
    %v445 = vunpack.c.l.b16 %v377
    %v446 = vunpack.c.l.b16 %v378
    %v447 = vunpack.c.l.b16 %v379
    %v448 = vunpack.c.l.b16 %v380
    %v449 = vunpack.c.l.b16 %v381
    %v450 = vunpack.c.l.b16 %v382
    %v451 = vunpack.c.l.b16 %v383
    %v452 = vunpack.c.l.b16 %v384
    %v453 = vpack.c.b16 %v446, %v445
    %v454 = vpack.c.b16 %v448, %v447
    %v455 = vpack.c.b16 %v450, %v449
    %v456 = vpack.c.b16 %v452, %v451
    %v458 = vsel %vm291, %v453, 0
    %v461 = vsel %vm291, %v454, 0
    %v464 = vsel %vm291, %v455, 0
    %v467 = vsel %vm291, %v456, 0
    %469 = vmatprep.subr.bf16.mxu0 0
    %470 = vmatpush1.bf16.msra.mxu0 0
    %471 = vmatprep.subr.bf16.mxu0 0
    %472 = vmatpush1.bf16.msra.mxu0 0
    %473 = vmatprep.subr.bf16.mxu0 0
    %474 = vmatpush1.bf16.msra.mxu0 0
    %475 = vmatprep.subr.bf16.mxu0 0
    %476 = vmatpush1.bf16.msra.mxu0 0
    %477 = vmatprep.subr.bf16.mxu0 0
    %478 = vmatpush1.bf16.msra.mxu0 %v388
    %479 = vmatprep.subr.bf16.mxu0 0
    %480 = vmatpush1.bf16.msra.mxu0 %v387
    %481 = vmatprep.subr.bf16.mxu0 0
    %482 = vmatpush1.bf16.msra.mxu0 %v386
    %483 = vmatprep.subr.bf16.mxu0 0
    %484 = vmatpush1.bf16.msra.mxu0 %v385
    %485 = vmatprep.subr.bf16.mxu0 0
    %486 = vmatpush2.bf16.msra.mxu0 0
    %487 = vmatprep.subr.bf16.mxu0 0
    %488 = vmatpush2.bf16.msra.mxu0 0
    %489 = vmatprep.subr.bf16.mxu0 0
    %490 = vmatpush2.bf16.msra.mxu0 0
    %491 = vmatprep.subr.bf16.mxu0 0
    %492 = vmatpush2.bf16.msra.mxu0 0
    %493 = vmatprep.subr.bf16.mxu0 0
    %494 = vmatpush2.bf16.msra.mxu0 0
    %495 = vmatprep.subr.bf16.mxu0 0
    %496 = vmatpush2.bf16.msra.mxu0 0
    %497 = vmatprep.subr.bf16.mxu0 0
    %498 = vmatpush2.bf16.msra.mxu0 0
    %499 = vmatprep.subr.bf16.mxu0 0
    %500 = vmatpush2.bf16.msra.mxu0 0
    %501 = vmatprep.mubr.bf16.mxu0 0
    %502 = vmatmul.mubr.bf16.gmra.mxu0 %v458
    %v503 = vpop.f32.mrf.mxu0
    %v504 = vadd.f32 %v400, %v503
    %v505 = vpop.f32.mrf.mxu0
    %v506 = vpop.f32.mrf.mxu0
    %v507 = vadd.f32 %v405, %v506
    %v508 = vpop.f32.mrf.mxu0
    %509 = vmatprep.mubr.bf16.mxu0 0
    %510 = vmatmul.mubr.bf16.gmra.mxu0 %v461
    %v511 = vpop.f32.mrf.mxu0
    %v512 = vadd.f32 %v410, %v511
    %v513 = vpop.f32.mrf.mxu0
    %v514 = vpop.f32.mrf.mxu0
    %v515 = vadd.f32 %v415, %v514
    %v516 = vpop.f32.mrf.mxu0
    %517 = vmatprep.mubr.bf16.mxu0 0
    %518 = vmatmul.mubr.bf16.gmra.mxu0 %v464
    %v519 = vpop.f32.mrf.mxu0
    %v520 = vadd.f32 %v420, %v519
    %v521 = vpop.f32.mrf.mxu0
    %v522 = vpop.f32.mrf.mxu0
    %v523 = vadd.f32 %v425, %v522
    %v524 = vpop.f32.mrf.mxu0
    %525 = vmatprep.mubr.bf16.mxu0 0
    %526 = vmatmul.mubr.bf16.gmra.mxu0 %v467
    %v527 = vpop.f32.mrf.mxu0
    %v528 = vadd.f32 %v430, %v527
    %v529 = vpop.f32.mrf.mxu0
    %v530 = vpop.f32.mrf.mxu0
    %v531 = vadd.f32 %v435, %v530
    %v532 = vpop.f32.mrf.mxu0
    %533 = vdwg.mxu0
    %v534 = vmax.f32 %v504, 0.0
    %v535 = vmax.f32 %v507, 0.0
    %v536 = vmax.f32 %v512, 0.0
    %v537 = vmax.f32 %v515, 0.0
    %v538 = vmax.f32 %v520, 0.0
    %v539 = vmax.f32 %v523, 0.0
    %v540 = vmax.f32 %v528, 0.0
    %v541 = vmax.f32 %v531, 0.0
    %v542 = vld [vmem:[%s7] sm:$0x3]
    %v543 = vpack.c.bf16 %v535, %v534
    %v544 = vpack.c.bf16 %v537, %v536
    %v545 = vpack.c.bf16 %v539, %v538
    %v546 = vpack.c.bf16 %v541, %v540
    %v547 = vld [vmem:[%s8] sm:$0xf]
    %549 = vset.pattern.permute.xlu0 0
    %550 = vperm.xlu0 %549, %v547
    %v551 = vpop.permute.xlu0 %550
    %v554 = vsel %vm291, %v542, 0
    %556 = vmatprep.subr.bf16.mxu0 0
    %557 = vmatpush1.bf16.msra.mxu0 0
    %558 = vmatprep.subr.bf16.mxu0 0
    %559 = vmatpush1.bf16.msra.mxu0 0
    %560 = vmatprep.subr.bf16.mxu0 0
    %561 = vmatpush1.bf16.msra.mxu0 0
    %562 = vmatprep.subr.bf16.mxu0 0
    %563 = vmatpush1.bf16.msra.mxu0 0
    %564 = vmatprep.subr.bf16.mxu0 0
    %565 = vmatpush1.bf16.msra.mxu0 %v546
    %566 = vmatprep.subr.bf16.mxu0 0
    %567 = vmatpush1.bf16.msra.mxu0 %v545
    %568 = vmatprep.subr.bf16.mxu0 0
    %569 = vmatpush1.bf16.msra.mxu0 %v544
    %570 = vmatprep.subr.bf16.mxu0 0
    %571 = vmatpush1.bf16.msra.mxu0 %v543
    %572 = vmatprep.subr.bf16.mxu0 0
    %573 = vmatpush2.bf16.msra.mxu0 0
    %574 = vmatprep.subr.bf16.mxu0 0
    %575 = vmatpush2.bf16.msra.mxu0 0
    %576 = vmatprep.subr.bf16.mxu0 0
    %577 = vmatpush2.bf16.msra.mxu0 0
    %578 = vmatprep.subr.bf16.mxu0 0
    %579 = vmatpush2.bf16.msra.mxu0 0
    %580 = vmatprep.subr.bf16.mxu0 0
    %581 = vmatpush2.bf16.msra.mxu0 0
    %582 = vmatprep.subr.bf16.mxu0 0
    %583 = vmatpush2.bf16.msra.mxu0 0
    %584 = vmatprep.subr.bf16.mxu0 0
    %585 = vmatpush2.bf16.msra.mxu0 0
    %586 = vmatprep.subr.bf16.mxu0 0
    %587 = vmatpush2.bf16.msra.mxu0 0
    %588 = vmatprep.mubr.bf16.mxu0 0
    %589 = vmatmul.mubr.bf16.gmra.mxu0 %v554
    %v590 = vpop.f32.mrf.mxu0
    %v591 = vadd.f32 %v551, %v590
    %v592 = vpop.f32.mrf.mxu0
    %v593 = vpop.f32.mrf.mxu0
    %v594 = vpop.f32.mrf.mxu0
    %595 = vdwg.mxu0
    %596 = vst [vmem:[#allocation2] sm:$0xf] %v591
    // Predicated region
    $region38: #{tpu_custom_call.1} parent=1 // pred_check
      _
    $region39: #{tpu_custom_call.1} parent=1 // pred_check_branch
      %598 = sbr.rel (0) target = $region41
    $region40: #{tpu_custom_call.1} parent=1 // pred_region
      %s600 = ssub.s32 64, 64
      %601 = vsyncadd [#allocation3], %s600
      %s603 = sshll.u32 [#allocation2], 4
      %s604 = int_to_ptr.vmem [resolvable:$true] %s603
      %606 = dma.vmem_to_hbm [thread:$0]  %s604, 64, %s9, [#allocation3]
    $region41: #{tpu_custom_call.1} parent=1 // pred_fallthru
      _
    // Predicated region
    $region42: #{tpu_custom_call.1} parent=1 // pred_check
      _
    $region43: #{tpu_custom_call.1} parent=1 // pred_check_branch
      %608 = sbr.rel (0) target = $region45
    $region44: #{tpu_custom_call.1} parent=1 // pred_region
      %609 = dma.done [#allocation3], 64
    $region45: #{tpu_custom_call.1} parent=1 // pred_fallthru
      _
    %610 = vsyncpa [#allocation3], 1

</llo_original>
